<compile_context>
chip_gen: v7x
topology: tpu7x:2x2x1
jax: 0.10.0
libtpu: 0.0.40
codegen_flags: <defaults>
</compile_context>

<pallas_src>
import jax
import jax.numpy as jnp
from jax.experimental import pallas as pl
from jax.experimental.pallas import tpu as pltpu

DROPOUT_P = 0.2


def _round_up(x, m):
    return ((x + m - 1) // m) * m


def decoder_cell_kernel(packed_ref, wg_ref, wout_ref, bout_ref, drop_ref, out_ref):
    """One fused step: LSTMCell + Linear + dropout(h), dropout(c).

    packed_ref : (B, d_gate + H)   = [x | h | 1 | zero-pad | c]
    wg_ref     : (d_gate, 4H)      = [W_ih^T ; W_hh^T ; b_ih + b_hh ; zero-pad]
    wout_ref   : (O, H)            torch layout of self.out.weight
    bout_ref   : (1, O)
    drop_ref   : (B, 2H)           inverted-dropout scale for [h | c]
    out_ref    : (B, O + 2H)       = [out | dropout(h_new) | dropout(c_new)]
    """
    d_gate = wg_ref.shape[0]
    H = drop_ref.shape[-1] // 2
    O = wout_ref.shape[0]

    packed = packed_ref[...]
    xh1 = packed[:, :d_gate]          # [x | h | 1 | pad]
    c_prev = packed[:, d_gate:]       # previous cell state

    # Single merged gate matmul (bias folded into the last weight rows).
    gates = jnp.dot(xh1, wg_ref[...], preferred_element_type=jnp.float32)

    i_g = jax.nn.sigmoid(gates[:, 0:H])
    f_g = jax.nn.sigmoid(gates[:, H:2 * H])
    g_g = jnp.tanh(gates[:, 2 * H:3 * H])
    o_g = jax.nn.sigmoid(gates[:, 3 * H:4 * H])

    c_new = f_g * c_prev + i_g * g_g
    h_new = o_g * jnp.tanh(c_new)

    # self.out(h_new): Linear(hidden_size -> rnn_num_layers).
    # For O == 1 skip the MXU entirely (VPU multiply + lane reduction).
    if O == 1:
        out = jnp.sum(h_new * wout_ref[...], axis=-1, keepdims=True) + bout_ref[...]
    else:
        out = jax.lax.dot_general(
            h_new, wout_ref[...], (((1,), (1,)), ((), ())),
            preferred_element_type=jnp.float32) + bout_ref[...]

    # Inverted dropout on h_new and c_new via the precomputed scale tensor.
    drop = drop_ref[...]
    h_drop = h_new * drop[:, :H]
    c_drop = c_new * drop[:, H:]

    # Single packed store of all three results.
    out_ref[...] = jnp.concatenate([out, h_drop, c_drop], axis=-1)


def init_params(key, input_dim, hidden_size, rnn_num_layers=1):
    """Deterministic init matching the shapes of the PyTorch module,
    pre-stacked for the fused kernel."""
    k = float(hidden_size) ** -0.5
    keys = jax.random.split(key, 6)
    w_ih = jax.random.uniform(keys[0], (4 * hidden_size, input_dim),
                              minval=-k, maxval=k, dtype=jnp.float32)
    w_hh = jax.random.uniform(keys[1], (4 * hidden_size, hidden_size),
                              minval=-k, maxval=k, dtype=jnp.float32)
    b_ih = jax.random.uniform(keys[2], (4 * hidden_size,),
                              minval=-k, maxval=k, dtype=jnp.float32)
    b_hh = jax.random.uniform(keys[3], (4 * hidden_size,),
                              minval=-k, maxval=k, dtype=jnp.float32)
    w_out = jax.random.uniform(keys[4], (rnn_num_layers, hidden_size),
                               minval=-k, maxval=k, dtype=jnp.float32)
    b_out = jax.random.uniform(keys[5], (rnn_num_layers,),
                               minval=-k, maxval=k, dtype=jnp.float32)

    d_xh = input_dim + hidden_size
    d_gate = _round_up(d_xh + 1, 8)          # contraction width, sublane aligned
    pad = d_gate - d_xh - 1
    w_gates = jnp.concatenate(
        [w_ih.T,                              # (input_dim, 4H)
         w_hh.T,                              # (H, 4H)
         (b_ih + b_hh)[None, :],              # bias row (multiplied by the "1" column)
         jnp.zeros((pad, 4 * hidden_size), jnp.float32)],
        axis=0)                               # (d_gate, 4H)

    return {
        "w_gates": w_gates,                   # (d_gate, 4H)
        "w_out": w_out,                       # (O, H)  -- torch layout
        "b_out": b_out.reshape(1, -1),        # (1, O)
        "d_gate": d_gate,
    }


def decoder_cell(params, dec_input, prev_hidden, *, dropout_key=None,
                 training=True, dropout_p=DROPOUT_P):
    h0, c0 = prev_hidden
    B = dec_input.shape[0]
    H = h0.shape[-1]
    O = params["w_out"].shape[0]
    d_gate = params["d_gate"]
    pad = d_gate - (dec_input.shape[1] + H) - 1

    # Pack [x | h | 1 | zero-pad | c] into one input slab (one DMA descriptor).
    parts = [dec_input.astype(jnp.float32), h0.astype(jnp.float32),
             jnp.ones((B, 1), jnp.float32)]
    if pad > 0:
        parts.append(jnp.zeros((B, pad), jnp.float32))
    parts.append(c0.astype(jnp.float32))
    packed_in = jnp.concatenate(parts, axis=-1)         # (B, d_gate + H)

    # Inverted dropout scales for [h | c], generated with JAX's PRNG.
    if training:
        if dropout_key is None:
            dropout_key = jax.random.PRNGKey(0)
        keep = jax.random.bernoulli(dropout_key, 1.0 - dropout_p, (B, 2 * H))
        drop_scale = keep.astype(jnp.float32) * (1.0 / (1.0 - dropout_p))
    else:
        drop_scale = jnp.ones((B, 2 * H), jnp.float32)

    vmem = pl.BlockSpec(memory_space=pltpu.MemorySpace.VMEM)

    packed_out = pl.pallas_call(
        decoder_cell_kernel,
        out_shape=jax.ShapeDtypeStruct((B, O + 2 * H), jnp.float32),
        in_specs=[vmem] * 5,
        out_specs=vmem,
    )(packed_in, params["w_gates"], params["w_out"], params["b_out"], drop_scale)

    output = packed_out[:, :O]
    h_drop = packed_out[:, O:O + H]
    c_drop = packed_out[:, O + H:]
    return output, (h_drop, c_drop)


if __name__ == "__main__":
    B, INPUT_DIM, HIDDEN, RNN_NUM_LAYERS = 8, 16, 32, 1

    root = jax.random.PRNGKey(0)
    k_param, k_x, k_h, k_c, k_drop = jax.random.split(root, 5)

    params = init_params(k_param, INPUT_DIM, HIDDEN, RNN_NUM_LAYERS)
    dec_input = jax.random.normal(k_x, (B, INPUT_DIM), dtype=jnp.float32)
    h0 = jax.random.normal(k_h, (B, HIDDEN), dtype=jnp.float32)
    c0 = jax.random.normal(k_c, (B, HIDDEN), dtype=jnp.float32)

    output, (h_new, c_new) = decoder_cell(
        params, dec_input, (h0, c0), dropout_key=k_drop, training=True)
    jax.block_until_ready((output, h_new, c_new))

    assert output.shape == (B, RNN_NUM_LAYERS)
    assert h_new.shape == (B, HIDDEN)
    assert c_new.shape == (B, HIDDEN)
    assert bool(jnp.all(jnp.isfinite(output)))
    print("KERNEL_OK")
</pallas_src>

<mosaic_0001>
module attributes {stable_mosaic.version = 11 : i64} {
  func.func @decoder_cell_kernel(%arg0: memref<8x88xf32, #tpu.memory_space<vmem>>, %arg1: memref<56x128xf32, #tpu.memory_space<vmem>>, %arg2: memref<1x32xf32, #tpu.memory_space<vmem>>, %arg3: memref<1x1xf32, #tpu.memory_space<vmem>>, %arg4: memref<8x64xf32, #tpu.memory_space<vmem>>, %arg5: memref<8x65xf32, #tpu.memory_space<vmem>>) attributes {dimension_semantics = [], scalar_prefetch = 0 : i64, scratch_operands = 0 : i64, tpu.core_type = #tpu.core_type<tc>} {
    %c0 = arith.constant 0 : index
    %c0_0 = arith.constant 0 : index
    %0 = vector.load %arg0[%c0, %c0_0] : memref<8x88xf32, #tpu.memory_space<vmem>>, vector<8x88xf32>
    %1 = vector.extract_strided_slice %0 {offsets = [0, 0], sizes = [8, 56], strides = [1, 1]} : vector<8x88xf32> to vector<8x56xf32>
    %2 = vector.extract_strided_slice %0 {offsets = [0, 56], sizes = [8, 32], strides = [1, 1]} : vector<8x88xf32> to vector<8x32xf32>
    %c0_1 = arith.constant 0 : index
    %c0_2 = arith.constant 0 : index
    %3 = vector.load %arg1[%c0_1, %c0_2] : memref<56x128xf32, #tpu.memory_space<vmem>>, vector<56x128xf32>
    %cst = arith.constant dense<0.000000e+00> : vector<8x128xf32>
    %4 = tpu.matmul %1, %3, %cst {dimension_numbers = #tpu.dot_dimension_numbers<[1], [0], [0], [1], [0, 0, 1, 1], [], []>} : vector<8x56xf32>, vector<56x128xf32>, vector<8x128xf32> -> vector<8x128xf32>
    %5 = vector.extract_strided_slice %4 {offsets = [0, 0], sizes = [8, 32], strides = [1, 1]} : vector<8x128xf32> to vector<8x32xf32>
    %6 = arith.negf %5 : vector<8x32xf32>
    %7 = math.exp %6 : vector<8x32xf32>
    %cst_3 = arith.constant 1.000000e+00 : f32
    %8 = vector.broadcast %cst_3 : f32 to vector<8x32xf32>
    %9 = arith.addf %8, %7 : vector<8x32xf32>
    %10 = arith.divf %8, %9 : vector<8x32xf32>
    %11 = vector.extract_strided_slice %4 {offsets = [0, 32], sizes = [8, 32], strides = [1, 1]} : vector<8x128xf32> to vector<8x32xf32>
    %12 = arith.negf %11 : vector<8x32xf32>
    %13 = math.exp %12 : vector<8x32xf32>
    %cst_4 = arith.constant 1.000000e+00 : f32
    %14 = vector.broadcast %cst_4 : f32 to vector<8x32xf32>
    %15 = arith.addf %14, %13 : vector<8x32xf32>
    %16 = arith.divf %14, %15 : vector<8x32xf32>
    %17 = vector.extract_strided_slice %4 {offsets = [0, 64], sizes = [8, 32], strides = [1, 1]} : vector<8x128xf32> to vector<8x32xf32>
    %18 = math.tanh %17 : vector<8x32xf32>
    %19 = vector.extract_strided_slice %4 {offsets = [0, 96], sizes = [8, 32], strides = [1, 1]} : vector<8x128xf32> to vector<8x32xf32>
    %20 = arith.negf %19 : vector<8x32xf32>
    %21 = math.exp %20 : vector<8x32xf32>
    %cst_5 = arith.constant 1.000000e+00 : f32
    %22 = vector.broadcast %cst_5 : f32 to vector<8x32xf32>
    %23 = arith.addf %22, %21 : vector<8x32xf32>
    %24 = arith.divf %22, %23 : vector<8x32xf32>
    %25 = arith.mulf %16, %2 : vector<8x32xf32>
    %26 = arith.mulf %10, %18 : vector<8x32xf32>
    %27 = arith.addf %25, %26 : vector<8x32xf32>
    %28 = math.tanh %27 : vector<8x32xf32>
    %29 = arith.mulf %24, %28 : vector<8x32xf32>
    %c0_6 = arith.constant 0 : index
    %c0_7 = arith.constant 0 : index
    %30 = vector.load %arg2[%c0_6, %c0_7] : memref<1x32xf32, #tpu.memory_space<vmem>>, vector<1x32xf32>
    %31 = vector.broadcast %30 : vector<1x32xf32> to vector<8x32xf32>
    %32 = arith.mulf %29, %31 : vector<8x32xf32>
    %cst_8 = arith.constant dense<0.000000e+00> : vector<8xf32>
    %33 = vector.multi_reduction <add>, %32, %cst_8 [1] : vector<8x32xf32> to vector<8xf32>
    %34 = vector.shape_cast %33 : vector<8xf32> to vector<8x1xf32>
    %c0_9 = arith.constant 0 : index
    %c0_10 = arith.constant 0 : index
    %35 = vector.load %arg3[%c0_9, %c0_10] : memref<1x1xf32, #tpu.memory_space<vmem>>, vector<1x1xf32>
    %36 = vector.broadcast %35 : vector<1x1xf32> to vector<8x1xf32>
    %37 = arith.addf %34, %36 : vector<8x1xf32>
    %c0_11 = arith.constant 0 : index
    %c0_12 = arith.constant 0 : index
    %38 = vector.load %arg4[%c0_11, %c0_12] : memref<8x64xf32, #tpu.memory_space<vmem>>, vector<8x64xf32>
    %39 = vector.extract_strided_slice %38 {offsets = [0, 0], sizes = [8, 32], strides = [1, 1]} : vector<8x64xf32> to vector<8x32xf32>
    %40 = arith.mulf %29, %39 : vector<8x32xf32>
    %41 = vector.extract_strided_slice %38 {offsets = [0, 32], sizes = [8, 32], strides = [1, 1]} : vector<8x64xf32> to vector<8x32xf32>
    %42 = arith.mulf %27, %41 : vector<8x32xf32>
    %43 = tpu.concatenate %37, %40, %42 in 1 : vector<8x1xf32>, vector<8x32xf32>, vector<8x32xf32> -> vector<8x65xf32>
    %c0_13 = arith.constant 0 : index
    %c0_14 = arith.constant 0 : index
    %44 = vector.load %arg5[%c0_13, %c0_14] : memref<8x65xf32, #tpu.memory_space<vmem>>, vector<8x65xf32>
    tpu.vector_store %arg5[%c0_13, %c0_14], %43 {strides = array<i32>} : memref<8x65xf32, #tpu.memory_space<vmem>>, vector<8x65xf32>,
    return
  }
}

</mosaic_0001>

<llo_original>
// kernel: tpu_custom_call.1
$region0: #{tpu_custom_call.1}
  #allocation0 [shape = 'u32[]', space=smem, size = 0x4, offset = 0x4, fixed_abs, tag = 'smem constant byte address 0x4 - core index']
  #allocation1 [shape = 'u32[144,128]{1,0:T(1,128)}', space=vmem, size = 0x12000, scoped, tag = 'internal scratch']
  #allocation2 [shape = 'f32[1,1]{1,0:T(1,128)S(1)}', space=vmem, size = 0x200, scoped, tag = 'scoped memory for tpu_custom_call.1']
  %s0 = inlined_call_operand.hbm [shape: f32[8,88], index: 0, kind: input, shape index: {}]
  %s1 = inlined_call_operand.hbm [shape: f32[56,128], index: 1, kind: input, shape index: {}]
  %s2 = inlined_call_operand.vmem [shape: f32[1,32], index: 2, kind: input, shape index: {}]
  %s3 = inlined_call_operand.<no memory space> [shape: f32[1,1], index: 3, kind: input, shape index: {}]
  %s4 = inlined_call_operand.vmem [shape: f32[8,64], index: 4, kind: input, shape index: {}]
  %s5 = inlined_call_operand.hbm [shape: f32[8,65], index: 5, kind: output, shape index: {}]
  %s6 = sld [smem:[#allocation0]]
  $region38: #{tpu_custom_call.1} parent=0
    _
  %s8 = ssub.s32 1, %s6
  %s9 = scalar_select 0, %s8, %s6
  %v10 = vstv %s3
  %11 = vst [vmem:[#allocation2] sm:$0x1] %v10
  $region1: #{tpu_custom_call.1} parent=0
    #allocation3 [shape = 'u8[4096]{0}', space=vmem, size = 0x1000, scoped, tag = 'input window, operand 0, single buffered']
    #allocation4 [shape = 's32[1]{0}', space=sflag, size = 0x4, scoped, tag = 'scoped memory for tpu_custom_call.1']
    #allocation5 [shape = 's32[1]{0}', space=sflag, size = 0x4, scoped, tag = 'scoped memory for tpu_custom_call.1']
    #allocation6 [shape = 'u8[28672]{0}', space=vmem, size = 0x7000, scoped, tag = 'input window, operand 1, single buffered']
    #allocation7 [shape = 's32[1]{0}', space=sflag, size = 0x4, scoped, tag = 'scoped memory for tpu_custom_call.1']
    #allocation8 [shape = 'u8[4096]{0}', space=vmem, size = 0x1000, scoped, tag = 'output window, operand 0, single buffered']
    %12 = vsyncpa [#allocation4], 0
    %13 = vsyncpa [#allocation7], 0
    %14 = vsyncpa [#allocation5], 0
    // Predicated region
    $region2: #{tpu_custom_call.1} parent=1 // pred_check
      _
    $region3: #{tpu_custom_call.1} parent=1 // pred_check_branch
      %16 = sbr.rel (0) target = $region5
    $region4: #{tpu_custom_call.1} parent=1 // pred_region
      %s18 = ssub.s32 128, 128
      %19 = vsyncadd [#allocation4], %s18
      %s21 = sshll.u32 [#allocation3], 4
      %s22 = int_to_ptr.vmem [resolvable:$true] %s21
      %24 = dma.hbm_to_vmem [thread:$0]  %s0, 128, %s22, [#allocation4]
    $region5: #{tpu_custom_call.1} parent=1 // pred_fallthru
      _
    // Predicated region
    $region6: #{tpu_custom_call.1} parent=1 // pred_check
      _
    $region7: #{tpu_custom_call.1} parent=1 // pred_check_branch
      %26 = sbr.rel (0) target = $region9
    $region8: #{tpu_custom_call.1} parent=1 // pred_region
      %s28 = ssub.s32 896, 896
      %29 = vsyncadd [#allocation7], %s28
      %s30 = sshll.u32 [#allocation6], 4
      %s31 = int_to_ptr.vmem [resolvable:$true] %s30
      %36 = dma.hbm_to_vmem [thread:$0]  %s1, 896, %s31, [#allocation7], 128, 128, 8
    $region9: #{tpu_custom_call.1} parent=1 // pred_fallthru
      _
    // Predicated region
    $region10: #{tpu_custom_call.1} parent=1 // pred_check
      _
    $region11: #{tpu_custom_call.1} parent=1 // pred_check_branch
      %38 = sbr.rel (0) target = $region13
    $region12: #{tpu_custom_call.1} parent=1 // pred_region
      _
    $region13: #{tpu_custom_call.1} parent=1 // pred_fallthru
      _
    // Predicated region
    $region14: #{tpu_custom_call.1} parent=1 // pred_check
      _
    $region15: #{tpu_custom_call.1} parent=1 // pred_check_branch
      %40 = sbr.rel (0) target = $region17
    $region16: #{tpu_custom_call.1} parent=1 // pred_region
      _
    $region17: #{tpu_custom_call.1} parent=1 // pred_fallthru
      _
    // Predicated region
    $region18: #{tpu_custom_call.1} parent=1 // pred_check
      _
    $region19: #{tpu_custom_call.1} parent=1 // pred_check_branch
      %42 = sbr.rel (0) target = $region21
    $region20: #{tpu_custom_call.1} parent=1 // pred_region
      _
    $region21: #{tpu_custom_call.1} parent=1 // pred_fallthru
      _
    // Predicated region
    $region22: #{tpu_custom_call.1} parent=1 // pred_check
      _
    $region23: #{tpu_custom_call.1} parent=1 // pred_check_branch
      %44 = sbr.rel (0) target = $region25
    $region24: #{tpu_custom_call.1} parent=1 // pred_region
      %45 = dma.done [#allocation4], 128
    $region25: #{tpu_custom_call.1} parent=1 // pred_fallthru
      _
    // Predicated region
    $region26: #{tpu_custom_call.1} parent=1 // pred_check
      _
    $region27: #{tpu_custom_call.1} parent=1 // pred_check_branch
      %47 = sbr.rel (0) target = $region29
    $region28: #{tpu_custom_call.1} parent=1 // pred_region
      %48 = dma.done [#allocation7], 896
    $region29: #{tpu_custom_call.1} parent=1 // pred_fallthru
      _
    %v49 = vld [vmem:[#allocation3] sm:$0xff]
    %v50 = vld [vmem:[#allocation6] sm:$0xff]
    %v51 = vld [vmem:[#allocation6 + $0x8] sm:$0xff]
    %v52 = vld [vmem:[#allocation6 + $0x10] sm:$0xff]
    %v53 = vld [vmem:[#allocation6 + $0x18] sm:$0xff]
    %v54 = vld [vmem:[#allocation6 + $0x20] sm:$0xff]
    %v55 = vld [vmem:[#allocation6 + $0x28] sm:$0xff]
    %v56 = vld [vmem:[#allocation6 + $0x30] sm:$0xff]
    %vm57 = vcmask 457728
    %v59 = vsel %vm57, %v49, 0
    %61 = vmatprep.subr.mxu0 0.0
    %62 = vmatpush1.msra.mxu0 %v50
    %63 = vmatprep.subr.mxu0 0.0
    %64 = vmatpush1.msra.mxu0 %v51
    %65 = vmatprep.subr.mxu0 0.0
    %66 = vmatpush1.msra.mxu0 %v52
    %67 = vmatprep.subr.mxu0 0.0
    %68 = vmatpush1.msra.mxu0 %v53
    %69 = vmatprep.subr.mxu0 0.0
    %70 = vmatpush1.msra.mxu0 %v54
    %71 = vmatprep.subr.mxu0 0.0
    %72 = vmatpush1.msra.mxu0 %v55
    %73 = vmatprep.subr.mxu0 0.0
    %74 = vmatpush1.msra.mxu0 %v56
    %75 = vmatprep.subr.mxu0 0.0
    %76 = vmatpush1.msra.mxu0 0.0
    %77 = vmatprep.subr.mxu0 0.0
    %78 = vmatpush1.msra.mxu0 0.0
    %79 = vmatprep.subr.mxu0 0.0
    %80 = vmatpush1.msra.mxu0 0.0
    %81 = vmatprep.subr.mxu0 0.0
    %82 = vmatpush1.msra.mxu0 0.0
    %83 = vmatprep.subr.mxu0 0.0
    %84 = vmatpush1.msra.mxu0 0.0
    %85 = vmatprep.subr.mxu0 0.0
    %86 = vmatpush1.msra.mxu0 0.0
    %87 = vmatprep.subr.mxu0 0.0
    %88 = vmatpush1.msra.mxu0 0.0
    %89 = vmatprep.subr.mxu0 0.0
    %90 = vmatpush1.msra.mxu0 0.0
    %91 = vmatprep.subr.mxu0 0.0
    %92 = vmatpush1.msra.mxu0 0.0
    %93 = vmatprep.subr.mxu0 0.0
    %94 = vmatpush1.msra.mxu0 0.0
    %95 = vmatprep.subr.mxu0 0.0
    %96 = vmatpush1.msra.mxu0 0.0
    %97 = vmatprep.subr.mxu0 0.0
    %98 = vmatpush1.msra.mxu0 0.0
    %99 = vmatprep.subr.mxu0 0.0
    %100 = vmatpush1.msra.mxu0 0.0
    %101 = vmatprep.subr.mxu0 0.0
    %102 = vmatpush1.msra.mxu0 0.0
    %103 = vmatprep.subr.mxu0 0.0
    %104 = vmatpush1.msra.mxu0 0.0
    %105 = vmatprep.subr.mxu0 0.0
    %106 = vmatpush1.msra.mxu0 0.0
    %107 = vmatprep.subr.mxu0 0.0
    %108 = vmatpush1.msra.mxu0 0.0
    %109 = vmatprep.subr.mxu0 0.0
    %110 = vmatpush1.msra.mxu0 0.0
    %111 = vmatprep.subr.mxu0 0.0
    %112 = vmatpush1.msra.mxu0 0.0
    %113 = vmatprep.subr.mxu0 0.0
    %114 = vmatpush1.msra.mxu0 0.0
    %115 = vmatprep.subr.mxu0 0.0
    %116 = vmatpush1.msra.mxu0 0.0
    %117 = vmatprep.subr.mxu0 0.0
    %118 = vmatpush1.msra.mxu0 0.0
    %119 = vmatprep.subr.mxu0 0.0
    %120 = vmatpush1.msra.mxu0 0.0
    %121 = vmatprep.subr.mxu0 0.0
    %122 = vmatpush1.msra.mxu0 0.0
    %123 = vmatprep.subr.mxu0 0.0
    %124 = vmatpush1.msra.mxu0 0.0
    %125 = vmatprep.mubr.f32.mxu0 0.0
    %126 = vmatmul.mubr.f32.gmra.mrb[0].mxu0 %v59
    %v127 = vpop.f32.mrb[0].mxu0
    %v128 = vadd.f32 0.0, %v127
    %v129 = vpop.f32.mrb[0].mxu0
    %130 = vdwg.mxu0
    %v131 = vxor.u32 %v128, 2147483648
    %v132 = vmul.f32 %v131, 1.442695
    %v133 = vpow.pop %v132
    %v134 = vadd.f32 %v133, 1.0
    %v135 = vrcp.pop %v134
    %v136 = vmul.f32 1.0, %v135
    %v137 = vtanh.pop %v128
    %138 = vrot.lane.b32.xlu0 %v49, 104
    %v139 = vpop.permute.xlu0 %138
    %v141 = vmul.f32 %v136, %v139
    %143 = vrot.lane.b32.xlu0 %v137, 64
    %v144 = vpop.permute.xlu0 %143
    %v146 = vmul.f32 %v136, %v144
    %148 = vrot.lane.b32.xlu0 %v146, 32
    %v149 = vpop.permute.xlu0 %148
    %v151 = vadd.f32 %v141, %v149
    %v152 = vtanh.pop %v151
    %154 = vrot.lane.b32.xlu0 %v152, 64
    %v155 = vpop.permute.xlu0 %154
    %v157 = vmul.f32 %v136, %v155
    %v158 = vld [vmem:[%s2] sm:$0x1]
    %v160 = vlaneseq
    %v161 = vshrl.u32 %v160, 7
    %v162 = vsub.s32 0, %v161
    %v163 = vrot.slane %v158, %v162
    %164 = vrot.lane.b32.xlu0 %v163, 96
    %v165 = vpop.permute.xlu0 %164
    %v167 = vmul.f32 %v157, %v165
    %169 = vrot.lane.b32.xlu0 %v167, 32
    %v170 = vpop.permute.xlu0 %169
    %vm172 = vcmask 261120
    %v173 = vsel %vm172, %v170, 0.0
    %174 = vadd.xlane.f32.xlu0 %v173
    %v175 = vpop.xlane.xlu0 %174
    %v176 = vld [vmem:[#allocation2] sm:$0x1]
    %v178 = vlaneseq
    %v179 = vshrl.u32 %v178, 7
    %v180 = vsub.s32 0, %v179
    %v181 = vrot.slane %v176, %v180
    %v183 = vadd.f32 %v175, %v181
    %v184 = vld [vmem:[%s4] sm:$0xff]
    %186 = vrot.lane.b32.xlu0 %v184, 96
    %v187 = vpop.permute.xlu0 %186
    %v189 = vmul.f32 %v157, %v187
    %v190 = vmul.f32 %v151, %v184
    %192 = vrot.lane.b32.xlu0 %v189, 33
    %v193 = vpop.permute.xlu0 %192
    %196 = vrot.lane.b32.xlu0 %v190, 1
    %v197 = vpop.permute.xlu0 %196
    %vm199 = vcmask 7168
    %v200 = vsel %vm199, %v183, %v193
    %vm201 = vcmask 269312
    %v202 = vsel %vm201, %v200, %v197
    %vm203 = vcmask 531456
    %204 = vst.msk [vmem:[#allocation8] sm:$0xff] %vm203, %v202
    // Predicated region
    $region30: #{tpu_custom_call.1} parent=1 // pred_check
      _
    $region31: #{tpu_custom_call.1} parent=1 // pred_check_branch
      %206 = sbr.rel (0) target = $region33
    $region32: #{tpu_custom_call.1} parent=1 // pred_region
      %s208 = ssub.s32 128, 128
      %209 = vsyncadd [#allocation5], %s208
      %s211 = sshll.u32 [#allocation8], 4
      %s212 = int_to_ptr.vmem [resolvable:$true] %s211
      %214 = dma.vmem_to_hbm [thread:$0]  %s212, 128, %s5, [#allocation5]
    $region33: #{tpu_custom_call.1} parent=1 // pred_fallthru
      _
    // Predicated region
    $region34: #{tpu_custom_call.1} parent=1 // pred_check
      _
    $region35: #{tpu_custom_call.1} parent=1 // pred_check_branch
      %216 = sbr.rel (0) target = $region37
    $region36: #{tpu_custom_call.1} parent=1 // pred_region
      %217 = dma.done [#allocation5], 128
    $region37: #{tpu_custom_call.1} parent=1 // pred_fallthru
      _
    %218 = vsyncpa [#allocation4], 1
    %219 = vsyncpa [#allocation7], 1
    %220 = vsyncpa [#allocation5], 1

</llo_original>
